<compile_context>
chip_gen: v5e
topology: v5e:2x2
jax: 0.10.0
libtpu: 0.0.40
codegen_flags: <defaults>
</compile_context>

<pallas_src>
import jax
import jax.numpy as jnp
from jax import lax
from jax.experimental import pallas as pl
from jax.experimental.pallas import tpu as pltpu

EPS = 1e-5


# ---------------------------------------------------------------------------
# Kernel: im2col-conv matmul + per-M-tile BN partial statistics
# ---------------------------------------------------------------------------
def _conv_stats_kernel(p_ref, w_ref, y_ref, stats_ref, acc_ref):
    # p_ref:     [TILE_M, TK]      im2col patch tile (f32 or bf16)
    # w_ref:     [TK, C_PAD]       reshaped conv-weight K-tile
    # y_ref:     [TILE_M, C_PAD]   conv output tile (compute_dtype)
    # stats_ref: [1, 2, C_PAD]     per-M-tile (sum, sum-of-squares) over rows
    # acc_ref:   [TILE_M, C_PAD]   f32 accumulator scratch (persists across K)
    k_id = pl.program_id(1)

    @pl.when(k_id == 0)
    def _init():
        acc_ref[...] = jnp.zeros_like(acc_ref)

    acc_ref[...] += jnp.dot(p_ref[...], w_ref[...],
                            preferred_element_type=jnp.float32)

    @pl.when(k_id == pl.num_programs(1) - 1)
    def _finalize():
        y = acc_ref[...]                                  # f32
        # Stats from the f32 accumulator *before* the (possibly bf16) cast.
        s = jnp.sum(y, axis=0, keepdims=True)             # [1, C_PAD]
        ss = jnp.sum(y * y, axis=0, keepdims=True)        # [1, C_PAD]
        stats_ref[...] = jnp.concatenate([s, ss], axis=0)[None]
        y_ref[...] = y.astype(y_ref.dtype)


# ---------------------------------------------------------------------------
# Tuning helpers
# ---------------------------------------------------------------------------
def _round_up(x, m):
    return (x + m - 1) // m * m


def _tpu_tuning():
    """Returns (tile VMEM budget, vmem_limit_bytes, assume_two_tensorcores)."""
    cap = 64 * 1024 * 1024
    try:
        info = pltpu.get_tpu_info()
        cap = int(getattr(info, "vmem_capacity_bytes", cap))
    except Exception:
        pass
    if cap >= 96 * 1024 * 1024:
        # v5e / v6e: 128 MiB VMEM, single TensorCore per chip -> go big.
        return 40 * 1024 * 1024, 96 * 1024 * 1024, False
    # v7x-class: 64 MiB per TensorCore, 2 TCs/chip -> stay conservative.
    return 20 * 1024 * 1024, 32 * 1024 * 1024, True


def _choose_k_tiling(k, c_pad, in_bytes, budget):
    """Pad K to a lane multiple; split into K-tiles if the weight is too big."""
    k_pad = _round_up(k, 128)
    tk = k_pad
    # keep the (double-buffered) weight K-tile within ~1/3 of the budget
    while tk > 128 and 2 * tk * c_pad * in_bytes > budget // 3:
        tk = _round_up(tk // 2, 128)
    num_k = -(-k_pad // tk)
    k_pad = num_k * tk
    return k_pad, tk, num_k


def _choose_tile_m(m, tk, c_pad, in_bytes, y_bytes, budget):
    """Largest TILE_M (multiple of 128) whose pipelined buffers fit the budget."""
    tile = 2048
    while tile > 128:
        need = (2 * tile * tk * in_bytes        # double-buffered patch tiles
                + 2 * tk * c_pad * in_bytes     # double-buffered weight tiles
                + 2 * tile * c_pad * y_bytes    # double-buffered y output tiles
                + tile * c_pad * 4              # f32 accumulator scratch
                + 2 * 2 * c_pad * 4)            # stats output tiles
        if need <= budget:
            break
        tile //= 2
    tile = max(tile, 128)
    # Don't over-pad tiny problems; prefer >= 2 M-tiles so a "parallel" grid
    # axis can feed both v7x TensorCores.
    tile = min(tile, max(128, _round_up(-(-m // 2), 128)))
    return tile


# ---------------------------------------------------------------------------
# im2col (XLA side) + forward wrapper
# ---------------------------------------------------------------------------
def im2col(x_nchw, kh, kw, stride, pad):
    """[N, C, H, W] -> patches [N*Ho*Wo, C*kh*kw] (inner order: C, kh, kw)."""
    n, c, h, w = x_nchw.shape
    xp = jnp.pad(x_nchw, ((0, 0), (0, 0), (pad, pad), (pad, pad)))
    ho = (h + 2 * pad - kh) // stride + 1
    wo = (w + 2 * pad - kw) // stride + 1
    slabs = []
    for i in range(kh):
        for j in range(kw):
            slabs.append(xp[:, :, i:i + stride * ho:stride, j:j + stride * wo:stride])
    p = jnp.stack(slabs, axis=2)                              # [N, C, kh*kw, Ho, Wo]
    p = p.reshape(n, c * kh * kw, ho, wo).transpose(0, 2, 3, 1)
    return p.reshape(n * ho * wo, c * kh * kw), ho, wo


def conv_block_forward(x, conv_w, conv_b, bn_gamma, bn_beta, *, stride=1, pad=1,
                       compute_dtype=jnp.bfloat16, tile_m=None):
    """x: [N, Cin, H, W] (NCHW).  conv_w: [Cout, Cin, KH, KW] (OIHW).

    compute_dtype: jnp.bfloat16 (default, native MXU throughput; f32
    accumulation + f32 BN/stats) or jnp.float32 (bit-faithful).
    """
    del conv_b  # a per-channel constant before train-mode BN cancels exactly.

    n = x.shape[0]
    c_out, c_in, kh, kw = conv_w.shape

    patches, ho, wo = im2col(x, kh, kw, stride, pad)          # [M, K]
    m, k = patches.shape

    in_bytes = jnp.dtype(compute_dtype).itemsize
    y_bytes = in_bytes
    tile_budget, vmem_limit, two_tc = _tpu_tuning()

    # 256-wide output blocks feed the 256-wide MXU (v6e/v7x) better when C_out
    # is large; 128 keeps padding waste small for narrow layers.
    c_pad = _round_up(c_out, 256) if c_out >= 192 else _round_up(c_out, 128)

    k_pad, tk, num_k = _choose_k_tiling(k, c_pad, in_bytes, tile_budget)
    if tile_m is None:
        tile_m = _choose_tile_m(m, tk, c_pad, in_bytes, y_bytes, tile_budget)
    m_pad = _round_up(m, tile_m)
    num_tiles = m_pad // tile_m
    if two_tc and 1 < num_tiles <= 8 and num_tiles % 2 == 1:
        # Keep v7x's two TensorCores balanced for small grids.
        m_pad += tile_m
        num_tiles += 1

    # Zero-padded rows / K columns contribute exactly 0 to the matmul and to
    # sum / sumsq (no bias is added), so dividing by the real M below keeps the
    # batch statistics exact.
    patches_p = jnp.pad(patches, ((0, m_pad - m), (0, k_pad - k))).astype(compute_dtype)
    w_mat = conv_w.reshape(c_out, c_in * kh * kw).T           # [K, C_out]
    w_mat = jnp.pad(w_mat, ((0, k_pad - k), (0, c_pad - c_out))).astype(compute_dtype)

    cparams = pltpu.CompilerParams(
        dimension_semantics=("parallel", "arbitrary"),        # M-tiles shard across TCs
        vmem_limit_bytes=vmem_limit)

    # ---- single pass: conv matmul + per-tile partial BN stats ----------------
    y_pad, stats = pl.pallas_call(
        _conv_stats_kernel,
        out_shape=(jax.ShapeDtypeStruct((m_pad, c_pad), compute_dtype),
                   jax.ShapeDtypeStruct((num_tiles, 2, c_pad), jnp.float32)),
        grid_spec=pltpu.PrefetchScalarGridSpec(
            num_scalar_prefetch=0,
            grid=(num_tiles, num_k),
            in_specs=[pl.BlockSpec((tile_m, tk), lambda i, kk: (i, kk)),
                      pl.BlockSpec((tk, c_pad), lambda i, kk: (kk, 0))],
            out_specs=[pl.BlockSpec((tile_m, c_pad), lambda i, kk: (i, 0)),
                       pl.BlockSpec((1, 2, c_pad), lambda i, kk: (i, 0, 0))],
            scratch_shapes=[pltpu.VMEM((tile_m, c_pad), jnp.float32)]),
        compiler_params=cparams,
    )(patches_p, w_mat)

    # ---- tiny global stats combine + BN fold (num_tiles x C, plain JAX) ------
    ch_sum = jnp.sum(stats[:, 0, :c_out], axis=0)             # [C_out]
    ch_sumsq = jnp.sum(stats[:, 1, :c_out], axis=0)           # [C_out]
    inv_m = 1.0 / float(m)
    mean = ch_sum * inv_m
    var = jnp.maximum(ch_sumsq * inv_m - mean * mean, 0.0)    # biased batch var
    inv_std = lax.rsqrt(var + EPS)
    scale = bn_gamma.astype(jnp.float32) * inv_std            # [C_out]
    shift = bn_beta.astype(jnp.float32) - mean * scale

    # ---- BN affine + ReLU folded into the slice / NHWC->NCHW epilogue --------
    # (pure elementwise -> XLA fuses it with the transpose it must run anyway;
    #  no second Pallas pass / extra HBM round-trip of the padded intermediate)
    y = y_pad[:m, :c_out].astype(jnp.float32)
    z = jnp.maximum(y * scale + shift, 0.0)
    return z.reshape(n, ho, wo, c_out).transpose(0, 3, 1, 2)


# ---------------------------------------------------------------------------
# Pure-JAX reference (matches PyTorch ConvBlock forward in training mode)
# ---------------------------------------------------------------------------
def conv_block_reference(x, conv_w, conv_b, bn_gamma, bn_beta, *, stride=1, pad=1):
    y = lax.conv_general_dilated(
        x, conv_w, window_strides=(stride, stride),
        padding=((pad, pad), (pad, pad)),
        dimension_numbers=("NCHW", "OIHW", "NCHW"))
    y = y + conv_b.reshape(1, -1, 1, 1)
    mean = jnp.mean(y, axis=(0, 2, 3), keepdims=True)
    var = jnp.mean((y - mean) ** 2, axis=(0, 2, 3), keepdims=True)
    xhat = (y - mean) * lax.rsqrt(var + EPS)
    z = xhat * bn_gamma.reshape(1, -1, 1, 1) + bn_beta.reshape(1, -1, 1, 1)
    return jnp.maximum(z, 0.0)


if __name__ == "__main__":
    # ConvBlock(in_channels=4, out_channels=8, kernel_size=3, stride=1, padding=1)
    N, C_IN, H, W = 2, 4, 16, 16
    C_OUT, KH, KW = 8, 3, 3
    STRIDE, PAD = 1, 1

    key = jax.random.PRNGKey(0)
    kx, kw_, kb, kg, kbe = jax.random.split(key, 5)

    x = jax.random.normal(kx, (N, C_IN, H, W), dtype=jnp.float32)
    conv_w = jax.random.normal(kw_, (C_OUT, C_IN, KH, KW), dtype=jnp.float32) * 0.1
    conv_b = jax.random.normal(kb, (C_OUT,), dtype=jnp.float32) * 0.1
    bn_gamma = 1.0 + 0.1 * jax.random.normal(kg, (C_OUT,), dtype=jnp.float32)
    bn_beta = 0.1 * jax.random.normal(kbe, (C_OUT,), dtype=jnp.float32)

    ref = jax.block_until_ready(
        conv_block_reference(x, conv_w, conv_b, bn_gamma, bn_beta,
                             stride=STRIDE, pad=PAD))

    # f32 path, automatic tiling (M=512 -> 2 M-tiles, 1 K-tile): exercises the
    # accumulator init/finalize and the partial-stats combine. Tight tolerance.
    out = jax.block_until_ready(
        conv_block_forward(x, conv_w, conv_b, bn_gamma, bn_beta,
                           stride=STRIDE, pad=PAD,
                           compute_dtype=jnp.float32))
    assert out.shape == (N, C_OUT, H, W), out.shape
    assert jnp.allclose(out, ref, rtol=1e-3, atol=1e-3), \
        float(jnp.max(jnp.abs(out - ref)))

    # bf16 MXU path (default) with explicit tile_m=128 -> 4-tile grid.
    out_bf16 = jax.block_until_ready(
        conv_block_forward(x, conv_w, conv_b, bn_gamma, bn_beta,
                           stride=STRIDE, pad=PAD,
                           compute_dtype=jnp.bfloat16, tile_m=128))
    assert out_bf16.shape == (N, C_OUT, H, W), out_bf16.shape
    assert jnp.allclose(out_bf16, ref, rtol=5e-2, atol=5e-2), \
        float(jnp.max(jnp.abs(out_bf16 - ref)))

    print("KERNEL_OK")
</pallas_src>

<mosaic_0001>
module attributes {stable_mosaic.version = 11 : i64} {
  func.func @_conv_stats_kernel(%arg0: i32, %arg1: i32, %arg2: memref<256x128xf32, #tpu.memory_space<vmem>>, %arg3: memref<128x128xf32, #tpu.memory_space<vmem>>, %arg4: memref<256x128xf32, #tpu.memory_space<vmem>>, %arg5: memref<1x2x128xf32, #tpu.memory_space<vmem>>, %arg6: memref<256x128xf32, #tpu.memory_space<vmem>>) attributes {dimension_semantics = [#tpu.dimension_semantics<parallel>, #tpu.dimension_semantics<arbitrary>], iteration_bounds = array<i64: 2, 1>, scalar_prefetch = 0 : i64, scratch_operands = 1 : i64, tpu.core_type = #tpu.core_type<tc>, window_params = [{transform_indices = @transform_0, window_bounds = array<i64: 256, 128>}, {transform_indices = @transform_1, window_bounds = array<i64: 128, 128>}, {transform_indices = @transform_2, window_bounds = array<i64: 256, 128>}, {transform_indices = @transform_3, window_bounds = array<i64: 1, 2, 128>}]} {
    %c0_i32 = arith.constant 0 : i32
    %0 = arith.cmpi eq, %arg1, %c0_i32 : i32
    %1 = arith.extui %0 : i1 to i32
    %c0_i32_0 = arith.constant 0 : i32
    %2 = arith.cmpi ne, %1, %c0_i32_0 : i32
    scf.if %2 {
      %cst_10 = arith.constant 0.000000e+00 : f32
      %12 = vector.broadcast %cst_10 : f32 to vector<256x128xf32>
      %c0_11 = arith.constant 0 : index
      %c0_12 = arith.constant 0 : index
      %13 = vector.load %arg6[%c0_11, %c0_12] : memref<256x128xf32, #tpu.memory_space<vmem>>, vector<256x128xf32>
      tpu.vector_store %arg6[%c0_11, %c0_12], %12 {strides = array<i32>} : memref<256x128xf32, #tpu.memory_space<vmem>>, vector<256x128xf32>,
    } else {
    }
    %c0 = arith.constant 0 : index
    %c0_1 = arith.constant 0 : index
    %3 = vector.load %arg6[%c0, %c0_1] : memref<256x128xf32, #tpu.memory_space<vmem>>, vector<256x128xf32>
    %c0_2 = arith.constant 0 : index
    %c0_3 = arith.constant 0 : index
    %4 = vector.load %arg2[%c0_2, %c0_3] : memref<256x128xf32, #tpu.memory_space<vmem>>, vector<256x128xf32>
    %c0_4 = arith.constant 0 : index
    %c0_5 = arith.constant 0 : index
    %5 = vector.load %arg3[%c0_4, %c0_5] : memref<128x128xf32, #tpu.memory_space<vmem>>, vector<128x128xf32>
    %cst = arith.constant dense<0.000000e+00> : vector<256x128xf32>
    %6 = tpu.matmul %4, %5, %cst {dimension_numbers = #tpu.dot_dimension_numbers<[1], [0], [0], [1], [0, 0, 1, 1], [], []>} : vector<256x128xf32>, vector<128x128xf32>, vector<256x128xf32> -> vector<256x128xf32>
    %7 = arith.addf %3, %6 : vector<256x128xf32>
    %c0_6 = arith.constant 0 : index
    %c0_7 = arith.constant 0 : index
    %8 = vector.load %arg6[%c0_6, %c0_7] : memref<256x128xf32, #tpu.memory_space<vmem>>, vector<256x128xf32>
    tpu.vector_store %arg6[%c0_6, %c0_7], %7 {strides = array<i32>} : memref<256x128xf32, #tpu.memory_space<vmem>>, vector<256x128xf32>,
    %c0_i32_8 = arith.constant 0 : i32
    %9 = arith.cmpi eq, %arg1, %c0_i32_8 : i32
    %10 = arith.extui %9 : i1 to i32
    %c0_i32_9 = arith.constant 0 : i32
    %11 = arith.cmpi ne, %10, %c0_i32_9 : i32
    scf.if %11 {
      %c0_10 = arith.constant 0 : index
      %c0_11 = arith.constant 0 : index
      %12 = vector.load %arg6[%c0_10, %c0_11] : memref<256x128xf32, #tpu.memory_space<vmem>>, vector<256x128xf32>
      %cst_12 = arith.constant dense<0.000000e+00> : vector<128xf32>
      %13 = vector.multi_reduction <add>, %12, %cst_12 [0] : vector<256x128xf32> to vector<128xf32>
      %14 = vector.shape_cast %13 : vector<128xf32> to vector<1x128xf32>
      %15 = arith.mulf %12, %12 : vector<256x128xf32>
      %cst_13 = arith.constant dense<0.000000e+00> : vector<128xf32>
      %16 = vector.multi_reduction <add>, %15, %cst_13 [0] : vector<256x128xf32> to vector<128xf32>
      %17 = vector.shape_cast %16 : vector<128xf32> to vector<1x128xf32>
      %18 = tpu.concatenate %14, %17 in 0 : vector<1x128xf32>, vector<1x128xf32> -> vector<2x128xf32>
      %19 = vector.shape_cast %18 : vector<2x128xf32> to vector<1x2x128xf32>
      %c0_14 = arith.constant 0 : index
      %c0_15 = arith.constant 0 : index
      %c0_16 = arith.constant 0 : index
      %20 = vector.load %arg5[%c0_14, %c0_15, %c0_16] : memref<1x2x128xf32, #tpu.memory_space<vmem>>, vector<1x2x128xf32>
      tpu.vector_store %arg5[%c0_14, %c0_15, %c0_16], %19 {strides = array<i32>} : memref<1x2x128xf32, #tpu.memory_space<vmem>>, vector<1x2x128xf32>,
      %c0_17 = arith.constant 0 : index
      %c0_18 = arith.constant 0 : index
      %21 = vector.load %arg4[%c0_17, %c0_18] : memref<256x128xf32, #tpu.memory_space<vmem>>, vector<256x128xf32>
      tpu.vector_store %arg4[%c0_17, %c0_18], %12 {strides = array<i32>} : memref<256x128xf32, #tpu.memory_space<vmem>>, vector<256x128xf32>,
    } else {
    }
    return
  }
  func.func @transform_0(%arg0: i32, %arg1: i32) -> (i32, i32) {
    %c0_i32 = arith.constant 0 : i32
    return %arg0, %arg1 : i32, i32
  }
  func.func @transform_1(%arg0: i32, %arg1: i32) -> (i32, i32) {
    %c0_i32 = arith.constant 0 : i32
    %c0_i32_0 = arith.constant 0 : i32
    return %arg1, %c0_i32 : i32, i32
  }
  func.func @transform_2(%arg0: i32, %arg1: i32) -> (i32, i32) {
    %c0_i32 = arith.constant 0 : i32
    %c0_i32_0 = arith.constant 0 : i32
    return %arg0, %c0_i32 : i32, i32
  }
  func.func @transform_3(%arg0: i32, %arg1: i32) -> (i32, i32, i32) {
    %c0_i32 = arith.constant 0 : i32
    %c0_i32_0 = arith.constant 0 : i32
    %c0_i32_1 = arith.constant 0 : i32
    return %arg0, %c0_i32, %c0_i32_0 : i32, i32, i32
  }
}

</mosaic_0001>

<llo_original>
// kernel: tpu_custom_call.1
$region0: #{tpu_custom_call.1}
  #allocation0 [shape = 'u32[]', space=smem, size = 0x4, offset = 0x4, fixed_abs, tag = 'smem constant byte address 0x4 - core index']
  #allocation1 [shape = 'u32[72,128]{1,0:T(1,128)}', space=vmem, size = 0x9000, scoped, tag = 'internal scratch']
  #allocation2 [shape = 'f32[256,128]{1,0:T(8,128)}', space=vmem, size = 0x20000, scoped, tag = 'scratch operand']
  %s0 = inlined_call_operand.hbm [shape: f32[512,128], index: 0, kind: input, shape index: {}]
  %s1 = inlined_call_operand.hbm [shape: f32[128,128], index: 1, kind: input, shape index: {}]
  %s2 = inlined_call_operand.hbm [shape: f32[512,128], index: 2, kind: output, shape index: {0}]
  %s3 = inlined_call_operand.hbm [shape: f32[2,2,128], index: 3, kind: output, shape index: {1}]
  %4 = xla_tuple %s2, %s3
  %s5 = sld [smem:[#allocation0]]
  $region65: #{tpu_custom_call.1} parent=0
    _
  %s7 = ssub.s32 1, %s5
  %s8 = scalar_select 0, %s7, %s5
  $region1: #{tpu_custom_call.1} parent=0
    #allocation3 [shape = 'u8[262144]{0}', space=vmem, size = 0x40000, scoped, tag = 'input window, operand 0']
    #allocation4 [shape = 's32[2]{0}', space=sflag, size = 0x8, scoped, tag = 'scoped memory for tpu_custom_call.1']
    #allocation5 [shape = 's32[2]{0}', space=sflag, size = 0x8, scoped, tag = 'scoped memory for tpu_custom_call.1']
    #allocation6 [shape = 'u8[65536]{0}', space=vmem, size = 0x10000, scoped, tag = 'input window, operand 1, single buffered']
    #allocation7 [shape = 's32[1]{0}', space=sflag, size = 0x4, scoped, tag = 'scoped memory for tpu_custom_call.1']
    #allocation8 [shape = 'u8[262144]{0}', space=vmem, size = 0x40000, scoped, tag = 'output window, operand 0']
    #allocation9 [shape = 'u8[2048]{0}', space=vmem, size = 0x800, scoped, tag = 'output window, operand 1']
    #allocation10 [shape = 's32[2]{0}', space=sflag, size = 0x8, scoped, tag = 'scoped memory for tpu_custom_call.1']
    %9 = vsyncpa [#allocation4], 0
    %s10 = scalar_lea.sflag [#allocation4], 1
    %11 = vsyncpa %s10, 0
    %12 = vsyncpa [#allocation7], 0
    %13 = vsyncpa [#allocation5], 0
    %s14 = scalar_lea.sflag [#allocation5], 1
    %15 = vsyncpa %s14, 0
    %16 = vsyncpa [#allocation10], 0
    %s17 = scalar_lea.sflag [#allocation10], 1
    %18 = vsyncpa %s17, 0
    loop: start=0, step=1, limit=4
    $region2: #{tpu_custom_call.1} parent=1 // loop_pre_header
      _
    $region3: #{tpu_custom_call.1} parent=1 // loop_header
      %s20 = sphi 0, %s24
      %p21 = scmp.ge.s32.totalorder %s20, 4
      %s27 = sphi 0, %s39
      %s28 = sphi 0, %s35
      %s29 = sphi 0, %s27
      %s30 = sphi 0, %s28
      %s31 = sphi 0, %s29
      %s32 = sphi 0, %s30
      %s44 = sphi 0, %s46
      %s47 = sphi 0, %s44
      %s48 = sphi 0, %s47
      %s64 = sphi 0, %s48
      %s70 = sphi 0, %s72
      %s73 = sphi 0, %s70
      %s74 = sphi 0, %s73
      %s90 = sphi 0, %s74
      %s96 = sphi 0, %s98
      %s99 = sphi 0, %s96
      %s100 = sphi 0, %s99
      %s116 = sphi 0, %s100
      %s122 = sphi 0, %s124
      %s125 = sphi 0, %s122
      %s126 = sphi 0, %s125
      %s142 = sphi 0, %s126
    $region4: #{tpu_custom_call.1} parent=1 // loop_header_branch
      %23 = sbr.rel (%p21) target = $region8
    $region5: #{tpu_custom_call.1} parent=1 // loop_body
      %s25 = ssub.s32 %s20, 1
      %s26 = ssub.s32 %s20, 2
      %s33 = sadd.s32 1, %s28
      %p34 = scmp.ge.s32.totalorder %s33, 1
      %s35 = scalar_select %p34, 0, %s33
      %s36 = sadd.s32 1, %s27
      %s37 = scalar_select %p34, %s36, %s27
      %p38 = scmp.ge.s32.totalorder %s37, 2
      %s39 = scalar_select %p38, 0, %s37
      %s40 = ssub.s32 %s27, %s39
      %s41 = ssub.s32 %s28, %s35
      %s42 = sor.u32 %s40, %s41
      %p43 = scmp.eq.s32.totalorder %s42, 0
      %s45 = sadd.s32 %s44, 1
      %s46 = scalar_select %p43, %s44, %s45
      %p49 = pneg %p43
      %p50 = scmp.eq.s32.totalorder %s20, 1
      %p51 = por %p49, %p50
      %p52 = scmp.ne.s32.totalorder %s44, %s47
      %p53 = scmp.eq.s32.totalorder %s20, 0
      %p54 = por %p52, %p53
      %p55 = scmp.ne.s32.totalorder %s44, %s47
      %p56 = scmp.eq.s32.totalorder %s25, 1
      %p57 = por %p55, %p56
      %p58 = scmp.ne.s32.totalorder %s47, %s48
      %p59 = scmp.eq.s32.totalorder %s25, 0
      %p60 = por %p58, %p59
      %p61 = scmp.ne.s32.totalorder %s47, %s48
      %p62 = scmp.eq.s32.totalorder %s26, 1
      %p63 = por %p61, %p62
      %p65 = scmp.ne.s32.totalorder %s48, %s64
      %p66 = scmp.eq.s32.totalorder %s26, 0
      %p67 = por %p65, %p66
      %s68 = ssub.s32 %s28, %s35
      %p69 = scmp.eq.s32.totalorder %s68, 0
      %s71 = sadd.s32 %s70, 1
      %s72 = scalar_select %p69, %s70, %s71
      %p75 = pneg %p69
      %p76 = scmp.eq.s32.totalorder %s20, 1
      %p77 = por %p75, %p76
      %p78 = scmp.ne.s32.totalorder %s70, %s73
      %p79 = scmp.eq.s32.totalorder %s20, 0
      %p80 = por %p78, %p79
      %p81 = scmp.ne.s32.totalorder %s70, %s73
      %p82 = scmp.eq.s32.totalorder %s25, 1
      %p83 = por %p81, %p82
      %p84 = scmp.ne.s32.totalorder %s73, %s74
      %p85 = scmp.eq.s32.totalorder %s25, 0
      %p86 = por %p84, %p85
      %p87 = scmp.ne.s32.totalorder %s73, %s74
      %p88 = scmp.eq.s32.totalorder %s26, 1
      %p89 = por %p87, %p88
      %p91 = scmp.ne.s32.totalorder %s74, %s90
      %p92 = scmp.eq.s32.totalorder %s26, 0
      %p93 = por %p91, %p92
      %s94 = ssub.s32 %s27, %s39
      %p95 = scmp.eq.s32.totalorder %s94, 0
      %s97 = sadd.s32 %s96, 1
      %s98 = scalar_select %p95, %s96, %s97
      %p101 = pneg %p95
      %p102 = scmp.eq.s32.totalorder %s20, 1
      %p103 = por %p101, %p102
      %p104 = scmp.ne.s32.totalorder %s96, %s99
      %p105 = scmp.eq.s32.totalorder %s20, 0
      %p106 = por %p104, %p105
      %p107 = scmp.ne.s32.totalorder %s96, %s99
      %p108 = scmp.eq.s32.totalorder %s25, 1
      %p109 = por %p107, %p108
      %p110 = scmp.ne.s32.totalorder %s99, %s100
      %p111 = scmp.eq.s32.totalorder %s25, 0
      %p112 = por %p110, %p111
      %p113 = scmp.ne.s32.totalorder %s99, %s100
      %p114 = scmp.eq.s32.totalorder %s26, 1
      %p115 = por %p113, %p114
      %p117 = scmp.ne.s32.totalorder %s100, %s116
      %p118 = scmp.eq.s32.totalorder %s26, 0
      %p119 = por %p117, %p118
      %s120 = ssub.s32 %s27, %s39
      %p121 = scmp.eq.s32.totalorder %s120, 0
      %s123 = sadd.s32 %s122, 1
      %s124 = scalar_select %p121, %s122, %s123
      %p127 = pneg %p121
      %p128 = scmp.eq.s32.totalorder %s20, 1
      %p129 = por %p127, %p128
      %p130 = scmp.ne.s32.totalorder %s122, %s125
      %p131 = scmp.eq.s32.totalorder %s20, 0
      %p132 = por %p130, %p131
      %p133 = scmp.ne.s32.totalorder %s122, %s125
      %p134 = scmp.eq.s32.totalorder %s25, 1
      %p135 = por %p133, %p134
      %p136 = scmp.ne.s32.totalorder %s125, %s126
      %p137 = scmp.eq.s32.totalorder %s25, 0
      %p138 = por %p136, %p137
      %p139 = scmp.ne.s32.totalorder %s125, %s126
      %p140 = scmp.eq.s32.totalorder %s26, 1
      %p141 = por %p139, %p140
      %p143 = scmp.ne.s32.totalorder %s126, %s142
      %p144 = scmp.eq.s32.totalorder %s26, 0
      %p145 = por %p143, %p144
      %p146 = scmp.le.s32.totalorder 1, %s20
      %p147 = scmp.lt.s32.totalorder %s20, 3
      %p148 = pnand %p146, %p147
      %p149 = pneg %p148
      // Predicated region
      $region9: #{tpu_custom_call.1} parent=5 // pred_check
        _
      $region10: #{tpu_custom_call.1} parent=5 // pred_check_branch
        %151 = sbr.rel (%p148) target = $region12
      $region11: #{tpu_custom_call.1} parent=5 // pred_region
        %s152 = ssub.s32 %s20, 1
        // Predicated region
        $region13: #{tpu_custom_call.1} parent=11 // pred_check
          %p153 = pneg %p86
        $region14: #{tpu_custom_call.1} parent=11 // pred_check_branch
          %155 = sbr.rel (%p153) target = $region16
        $region15: #{tpu_custom_call.1} parent=11 // pred_region
          %s156 = smul.u32 16, %s30
          %158 = vsyncadd [#allocation7], 0
          %s159 = smul.addr %s156, 8
          %s160 = scalar_lea.hbm %s1, %s159
          %s161 = sshll.u32 %s160, 4
          %s162 = int_to_ptr.hbm [resolvable:$true] %s161
          %s163 = sshll.u32 [#allocation6], 4
          %s164 = int_to_ptr.vmem [resolvable:$true] %s163
          %169 = dma.hbm_to_vmem [thread:$0]  %s162, 2048, %s164, [#allocation7], 128, 128, 8
        $region16: #{tpu_custom_call.1} parent=11 // pred_fallthru
          _
      $region12: #{tpu_custom_call.1} parent=5 // pred_fallthru
        _
      %p170 = scmp.lt.s32.totalorder %s20, 2
      // Predicated region
      $region17: #{tpu_custom_call.1} parent=5 // pred_check
        %p171 = pneg %p170
      $region18: #{tpu_custom_call.1} parent=5 // pred_check_branch
        %173 = sbr.rel (%p171) target = $region20
      $region19: #{tpu_custom_call.1} parent=5 // pred_region
        // Predicated region
        $region21: #{tpu_custom_call.1} parent=19 // pred_check
          %p174 = pneg %p54
        $region22: #{tpu_custom_call.1} parent=19 // pred_check_branch
          %176 = sbr.rel (%p174) target = $region24
        $region23: #{tpu_custom_call.1} parent=19 // pred_region
          %s177 = sand.u32 %s44, 1
          %s178 = scalar_lea.sflag [#allocation4], %s177
          %s179 = sand.u32 %s44, 1
          %s180 = smul.addr %s179, 256
          %s181 = scalar_lea.vmem [#allocation3], %s180
          %s182 = smul.u32 32, %s27
          %184 = vsyncadd %s178, 0
          %s185 = sadd.s32 %s28, %s182
          %s186 = smul.addr %s185, 8
          %s187 = scalar_lea.hbm %s0, %s186
          %s188 = sshll.u32 %s187, 4
          %s189 = int_to_ptr.hbm [resolvable:$true] %s188
          %s190 = sshll.u32 %s181, 4
          %s191 = int_to_ptr.vmem [resolvable:$true] %s190
          %196 = dma.hbm_to_vmem [thread:$0]  %s189, 4096, %s191, %s178, 128, 128, 8
        $region24: #{tpu_custom_call.1} parent=19 // pred_fallthru
          _
      $region20: #{tpu_custom_call.1} parent=5 // pred_fallthru
        _
      %p197 = scmp.le.s32.totalorder 1, %s20
      %p198 = scmp.lt.s32.totalorder %s20, 3
      %p199 = pnand %p197, %p198
      %p200 = pneg %p199
      // Predicated region
      $region25: #{tpu_custom_call.1} parent=5 // pred_check
        _
      $region26: #{tpu_custom_call.1} parent=5 // pred_check_branch
        %202 = sbr.rel (%p199) target = $region28
      $region27: #{tpu_custom_call.1} parent=5 // pred_region
        %s203 = ssub.s32 %s20, 1
        %s204 = sand.u32 %s47, 1
        %s205 = scalar_lea.sflag [#allocation4], %s204
        %s206 = sand.u32 %s47, 1
        %s207 = smul.addr %s206, 256
        %s208 = scalar_lea.vmem [#allocation3], %s207
        // Predicated region
        $region29: #{tpu_custom_call.1} parent=27 // pred_check
          %p209 = pneg %p60
        $region30: #{tpu_custom_call.1} parent=27 // pred_check_branch
          %211 = sbr.rel (%p209) target = $region32
        $region31: #{tpu_custom_call.1} parent=27 // pred_region
          %213 = dma.done %s205, 4096
        $region32: #{tpu_custom_call.1} parent=27 // pred_fallthru
          _
        // Predicated region
        $region33: #{tpu_custom_call.1} parent=27 // pred_check
          %p214 = pneg %p86
        $region34: #{tpu_custom_call.1} parent=27 // pred_check_branch
          %216 = sbr.rel (%p214) target = $region36
        $region35: #{tpu_custom_call.1} parent=27 // pred_region
          %218 = dma.done [#allocation7], 2048
        $region36: #{tpu_custom_call.1} parent=27 // pred_fallthru
          _
        %s219 = sand.u32 %s47, 1
        %s220 = scalar_lea.sflag [#allocation4], %s219
        %s221 = sand.u32 %s47, 1
        %s222 = smul.addr %s221, 256
        %s223 = scalar_lea.vmem [#allocation3], %s222
        %p224 = pneg %p60
        %p225 = pneg %p57
        %p226 = pneg %p86
        %p227 = pneg %p83
        %p228 = pneg %p112
        %p229 = pneg %p109
        %s230 = sand.u32 %s99, 1
        %s231 = scalar_lea.sflag [#allocation5], %s230
        %s232 = sand.u32 %s99, 1
        %s233 = smul.addr %s232, 256
        %s234 = scalar_lea.vmem [#allocation8], %s233
        %p235 = pneg %p138
        %p236 = pneg %p135
        %s237 = sand.u32 %s125, 1
        %s238 = scalar_lea.sflag [#allocation10], %s237
        %s239 = sand.u32 %s125, 1
        %s240 = smul.addr %s239, 2
        %s241 = scalar_lea.vmem [#allocation9], %s240
        %s242 = smul.u32 32, %s29
        %s243 = smul.u32 16, %s30
        %s244 = smul.u32 32, %s29
        %p245 = scmp.eq.s32.totalorder %s30, 0
        // Predicated region
        $region37: #{tpu_custom_call.1} parent=27 // pred_check
          %p246 = pneg %p245
        $region38: #{tpu_custom_call.1} parent=27 // pred_check_branch
          %248 = sbr.rel (%p246) target = $region40
        $region39: #{tpu_custom_call.1} parent=27 // pred_region
          %249 = vst [vmem:[#allocation2] sm:$0xff] 0.0
          %250 = vst [vmem:[#allocation2 + $0x8] sm:$0xff] 0.0
          %251 = vst [vmem:[#allocation2 + $0x10] sm:$0xff] 0.0
          %252 = vst [vmem:[#allocation2 + $0x18] sm:$0xff] 0.0
          %253 = vst [vmem:[#allocation2 + $0x20] sm:$0xff] 0.0
          %254 = vst [vmem:[#allocation2 + $0x28] sm:$0xff] 0.0
          %255 = vst [vmem:[#allocation2 + $0x30] sm:$0xff] 0.0
          %256 = vst [vmem:[#allocation2 + $0x38] sm:$0xff] 0.0
          %257 = vst [vmem:[#allocation2 + $0x40] sm:$0xff] 0.0
          %258 = vst [vmem:[#allocation2 + $0x48] sm:$0xff] 0.0
          %259 = vst [vmem:[#allocation2 + $0x50] sm:$0xff] 0.0
          %260 = vst [vmem:[#allocation2 + $0x58] sm:$0xff] 0.0
          %261 = vst [vmem:[#allocation2 + $0x60] sm:$0xff] 0.0
          %262 = vst [vmem:[#allocation2 + $0x68] sm:$0xff] 0.0
          %263 = vst [vmem:[#allocation2 + $0x70] sm:$0xff] 0.0
          %264 = vst [vmem:[#allocation2 + $0x78] sm:$0xff] 0.0
          %265 = vst [vmem:[#allocation2 + $0x80] sm:$0xff] 0.0
          %266 = vst [vmem:[#allocation2 + $0x88] sm:$0xff] 0.0
          %267 = vst [vmem:[#allocation2 + $0x90] sm:$0xff] 0.0
          %268 = vst [vmem:[#allocation2 + $0x98] sm:$0xff] 0.0
          %269 = vst [vmem:[#allocation2 + $0xa0] sm:$0xff] 0.0
          %270 = vst [vmem:[#allocation2 + $0xa8] sm:$0xff] 0.0
          %271 = vst [vmem:[#allocation2 + $0xb0] sm:$0xff] 0.0
          %272 = vst [vmem:[#allocation2 + $0xb8] sm:$0xff] 0.0
          %273 = vst [vmem:[#allocation2 + $0xc0] sm:$0xff] 0.0
          %274 = vst [vmem:[#allocation2 + $0xc8] sm:$0xff] 0.0
          %275 = vst [vmem:[#allocation2 + $0xd0] sm:$0xff] 0.0
          %276 = vst [vmem:[#allocation2 + $0xd8] sm:$0xff] 0.0
          %277 = vst [vmem:[#allocation2 + $0xe0] sm:$0xff] 0.0
          %278 = vst [vmem:[#allocation2 + $0xe8] sm:$0xff] 0.0
          %279 = vst [vmem:[#allocation2 + $0xf0] sm:$0xff] 0.0
          %280 = vst [vmem:[#allocation2 + $0xf8] sm:$0xff] 0.0
        $region40: #{tpu_custom_call.1} parent=27 // pred_fallthru
          _
        %v281 = vld [vmem:[#allocation2] sm:$0xff]
        %v282 = vld [vmem:[#allocation2 + $0x8] sm:$0xff]
        %v283 = vld [vmem:[#allocation2 + $0x10] sm:$0xff]
        %v284 = vld [vmem:[#allocation2 + $0x18] sm:$0xff]
        %v285 = vld [vmem:[#allocation2 + $0x20] sm:$0xff]
        %v286 = vld [vmem:[#allocation2 + $0x28] sm:$0xff]
        %v287 = vld [vmem:[#allocation2 + $0x30] sm:$0xff]
        %v288 = vld [vmem:[#allocation2 + $0x38] sm:$0xff]
        %v289 = vld [vmem:[#allocation2 + $0x40] sm:$0xff]
        %v290 = vld [vmem:[#allocation2 + $0x48] sm:$0xff]
        %v291 = vld [vmem:[#allocation2 + $0x50] sm:$0xff]
        %v292 = vld [vmem:[#allocation2 + $0x58] sm:$0xff]
        %v293 = vld [vmem:[#allocation2 + $0x60] sm:$0xff]
        %v294 = vld [vmem:[#allocation2 + $0x68] sm:$0xff]
        %v295 = vld [vmem:[#allocation2 + $0x70] sm:$0xff]
        %v296 = vld [vmem:[#allocation2 + $0x78] sm:$0xff]
        %v297 = vld [vmem:[#allocation2 + $0x80] sm:$0xff]
        %v298 = vld [vmem:[#allocation2 + $0x88] sm:$0xff]
        %v299 = vld [vmem:[#allocation2 + $0x90] sm:$0xff]
        %v300 = vld [vmem:[#allocation2 + $0x98] sm:$0xff]
        %v301 = vld [vmem:[#allocation2 + $0xa0] sm:$0xff]
        %v302 = vld [vmem:[#allocation2 + $0xa8] sm:$0xff]
        %v303 = vld [vmem:[#allocation2 + $0xb0] sm:$0xff]
        %v304 = vld [vmem:[#allocation2 + $0xb8] sm:$0xff]
        %v305 = vld [vmem:[#allocation2 + $0xc0] sm:$0xff]
        %v306 = vld [vmem:[#allocation2 + $0xc8] sm:$0xff]
        %v307 = vld [vmem:[#allocation2 + $0xd0] sm:$0xff]
        %v308 = vld [vmem:[#allocation2 + $0xd8] sm:$0xff]
        %v309 = vld [vmem:[#allocation2 + $0xe0] sm:$0xff]
        %v310 = vld [vmem:[#allocation2 + $0xe8] sm:$0xff]
        %v311 = vld [vmem:[#allocation2 + $0xf0] sm:$0xff]
        %v312 = vld [vmem:[#allocation2 + $0xf8] sm:$0xff]
        %v313 = vld [vmem:[%s208] sm:$0xff]
        %v314 = vld [vmem:[%s208 + $0x8] sm:$0xff]
        %v315 = vld [vmem:[%s208 + $0x10] sm:$0xff]
        %v316 = vld [vmem:[%s208 + $0x18] sm:$0xff]
        %v317 = vld [vmem:[%s208 + $0x20] sm:$0xff]
        %v318 = vld [vmem:[%s208 + $0x28] sm:$0xff]
        %v319 = vld [vmem:[%s208 + $0x30] sm:$0xff]
        %v320 = vld [vmem:[%s208 + $0x38] sm:$0xff]
        %v321 = vld [vmem:[%s208 + $0x40] sm:$0xff]
        %v322 = vld [vmem:[%s208 + $0x48] sm:$0xff]
        %v323 = vld [vmem:[%s208 + $0x50] sm:$0xff]
        %v324 = vld [vmem:[%s208 + $0x58] sm:$0xff]
        %v325 = vld [vmem:[%s208 + $0x60] sm:$0xff]
        %v326 = vld [vmem:[%s208 + $0x68] sm:$0xff]
        %v327 = vld [vmem:[%s208 + $0x70] sm:$0xff]
        %v328 = vld [vmem:[%s208 + $0x78] sm:$0xff]
        %v329 = vld [vmem:[%s208 + $0x80] sm:$0xff]
        %v330 = vld [vmem:[%s208 + $0x88] sm:$0xff]
        %v331 = vld [vmem:[%s208 + $0x90] sm:$0xff]
        %v332 = vld [vmem:[%s208 + $0x98] sm:$0xff]
        %v333 = vld [vmem:[%s208 + $0xa0] sm:$0xff]
        %v334 = vld [vmem:[%s208 + $0xa8] sm:$0xff]
        %v335 = vld [vmem:[%s208 + $0xb0] sm:$0xff]
        %v336 = vld [vmem:[%s208 + $0xb8] sm:$0xff]
        %v337 = vld [vmem:[%s208 + $0xc0] sm:$0xff]
        %v338 = vld [vmem:[%s208 + $0xc8] sm:$0xff]
        %v339 = vld [vmem:[%s208 + $0xd0] sm:$0xff]
        %v340 = vld [vmem:[%s208 + $0xd8] sm:$0xff]
        %v341 = vld [vmem:[%s208 + $0xe0] sm:$0xff]
        %v342 = vld [vmem:[%s208 + $0xe8] sm:$0xff]
        %v343 = vld [vmem:[%s208 + $0xf0] sm:$0xff]
        %v344 = vld [vmem:[%s208 + $0xf8] sm:$0xff]
        %v345 = vld [vmem:[#allocation6] sm:$0xff]
        %v346 = vld [vmem:[#allocation6 + $0x8] sm:$0xff]
        %v347 = vld [vmem:[#allocation6 + $0x10] sm:$0xff]
        %v348 = vld [vmem:[#allocation6 + $0x18] sm:$0xff]
        %v349 = vld [vmem:[#allocation6 + $0x20] sm:$0xff]
        %v350 = vld [vmem:[#allocation6 + $0x28] sm:$0xff]
        %v351 = vld [vmem:[#allocation6 + $0x30] sm:$0xff]
        %v352 = vld [vmem:[#allocation6 + $0x38] sm:$0xff]
        %v353 = vld [vmem:[#allocation6 + $0x40] sm:$0xff]
        %v354 = vld [vmem:[#allocation6 + $0x48] sm:$0xff]
        %v355 = vld [vmem:[#allocation6 + $0x50] sm:$0xff]
        %v356 = vld [vmem:[#allocation6 + $0x58] sm:$0xff]
        %v357 = vld [vmem:[#allocation6 + $0x60] sm:$0xff]
        %v358 = vld [vmem:[#allocation6 + $0x68] sm:$0xff]
        %v359 = vld [vmem:[#allocation6 + $0x70] sm:$0xff]
        %v360 = vld [vmem:[#allocation6 + $0x78] sm:$0xff]
        %361 = vmatpush.msra.mxu0 %v360
        %362 = vmatpush.msra.mxu0 %v359
        %363 = vmatpush.msra.mxu0 %v358
        %364 = vmatpush.msra.mxu0 %v357
        %365 = vmatpush.msra.mxu0 %v356
        %366 = vmatpush.msra.mxu0 %v355
        %367 = vmatpush.msra.mxu0 %v354
        %368 = vmatpush.msra.mxu0 %v353
        %369 = vmatpush.msra.mxu0 %v352
        %370 = vmatpush.msra.mxu0 %v351
        %371 = vmatpush.msra.mxu0 %v350
        %372 = vmatpush.msra.mxu0 %v349
        %373 = vmatpush.msra.mxu0 %v348
        %374 = vmatpush.msra.mxu0 %v347
        %375 = vmatpush.msra.mxu0 %v346
        %376 = vmatpush.msra.mxu0 %v345
        %377 = vmatmul.f32.gmra.mxu0 %v313
        %v378 = vpop.f32.mrf.mxu0
        %v379 = vadd.f32 0.0, %v378
        %380 = vmatmul.f32.gmra.mxu0 %v314
        %v381 = vpop.f32.mrf.mxu0
        %v382 = vadd.f32 0.0, %v381
        %383 = vmatmul.f32.gmra.mxu0 %v315
        %v384 = vpop.f32.mrf.mxu0
        %v385 = vadd.f32 0.0, %v384
        %386 = vmatmul.f32.gmra.mxu0 %v316
        %v387 = vpop.f32.mrf.mxu0
        %v388 = vadd.f32 0.0, %v387
        %389 = vmatmul.f32.gmra.mxu0 %v317
        %v390 = vpop.f32.mrf.mxu0
        %v391 = vadd.f32 0.0, %v390
        %392 = vmatmul.f32.gmra.mxu0 %v318
        %v393 = vpop.f32.mrf.mxu0
        %v394 = vadd.f32 0.0, %v393
        %395 = vmatmul.f32.gmra.mxu0 %v319
        %v396 = vpop.f32.mrf.mxu0
        %v397 = vadd.f32 0.0, %v396
        %398 = vmatmul.f32.gmra.mxu0 %v320
        %v399 = vpop.f32.mrf.mxu0
        %v400 = vadd.f32 0.0, %v399
        %401 = vmatmul.f32.gmra.mxu0 %v321
        %v402 = vpop.f32.mrf.mxu0
        %v403 = vadd.f32 0.0, %v402
        %404 = vmatmul.f32.gmra.mxu0 %v322
        %v405 = vpop.f32.mrf.mxu0
        %v406 = vadd.f32 0.0, %v405
        %407 = vmatmul.f32.gmra.mxu0 %v323
        %v408 = vpop.f32.mrf.mxu0
        %v409 = vadd.f32 0.0, %v408
        %410 = vmatmul.f32.gmra.mxu0 %v324
        %v411 = vpop.f32.mrf.mxu0
        %v412 = vadd.f32 0.0, %v411
        %413 = vmatmul.f32.gmra.mxu0 %v325
        %v414 = vpop.f32.mrf.mxu0
        %v415 = vadd.f32 0.0, %v414
        %416 = vmatmul.f32.gmra.mxu0 %v326
        %v417 = vpop.f32.mrf.mxu0
        %v418 = vadd.f32 0.0, %v417
        %419 = vmatmul.f32.gmra.mxu0 %v327
        %v420 = vpop.f32.mrf.mxu0
        %v421 = vadd.f32 0.0, %v420
        %422 = vmatmul.f32.gmra.mxu0 %v328
        %v423 = vpop.f32.mrf.mxu0
        %v424 = vadd.f32 0.0, %v423
        %425 = vmatmul.f32.gmra.mxu0 %v329
        %v426 = vpop.f32.mrf.mxu0
        %v427 = vadd.f32 0.0, %v426
        %428 = vmatmul.f32.gmra.mxu0 %v330
        %v429 = vpop.f32.mrf.mxu0
        %v430 = vadd.f32 0.0, %v429
        %431 = vmatmul.f32.gmra.mxu0 %v331
        %v432 = vpop.f32.mrf.mxu0
        %v433 = vadd.f32 0.0, %v432
        %434 = vmatmul.f32.gmra.mxu0 %v332
        %v435 = vpop.f32.mrf.mxu0
        %v436 = vadd.f32 0.0, %v435
        %437 = vmatmul.f32.gmra.mxu0 %v333
        %v438 = vpop.f32.mrf.mxu0
        %v439 = vadd.f32 0.0, %v438
        %440 = vmatmul.f32.gmra.mxu0 %v334
        %v441 = vpop.f32.mrf.mxu0
        %v442 = vadd.f32 0.0, %v441
        %443 = vmatmul.f32.gmra.mxu0 %v335
        %v444 = vpop.f32.mrf.mxu0
        %v445 = vadd.f32 0.0, %v444
        %446 = vmatmul.f32.gmra.mxu0 %v336
        %v447 = vpop.f32.mrf.mxu0
        %v448 = vadd.f32 0.0, %v447
        %449 = vmatmul.f32.gmra.mxu0 %v337
        %v450 = vpop.f32.mrf.mxu0
        %v451 = vadd.f32 0.0, %v450
        %452 = vmatmul.f32.gmra.mxu0 %v338
        %v453 = vpop.f32.mrf.mxu0
        %v454 = vadd.f32 0.0, %v453
        %455 = vmatmul.f32.gmra.mxu0 %v339
        %v456 = vpop.f32.mrf.mxu0
        %v457 = vadd.f32 0.0, %v456
        %458 = vmatmul.f32.gmra.mxu0 %v340
        %v459 = vpop.f32.mrf.mxu0
        %v460 = vadd.f32 0.0, %v459
        %461 = vmatmul.f32.gmra.mxu0 %v341
        %v462 = vpop.f32.mrf.mxu0
        %v463 = vadd.f32 0.0, %v462
        %464 = vmatmul.f32.gmra.mxu0 %v342
        %v465 = vpop.f32.mrf.mxu0
        %v466 = vadd.f32 0.0, %v465
        %467 = vmatmul.f32.gmra.mxu0 %v343
        %v468 = vpop.f32.mrf.mxu0
        %v469 = vadd.f32 0.0, %v468
        %470 = vmatmul.f32.gmra.mxu0 %v344
        %v471 = vpop.f32.mrf.mxu0
        %v472 = vadd.f32 0.0, %v471
        %473 = vdwg.mxu0
        %v474 = vadd.f32 %v281, %v379
        %v475 = vadd.f32 %v282, %v382
        %v476 = vadd.f32 %v283, %v385
        %v477 = vadd.f32 %v284, %v388
        %v478 = vadd.f32 %v285, %v391
        %v479 = vadd.f32 %v286, %v394
        %v480 = vadd.f32 %v287, %v397
        %v481 = vadd.f32 %v288, %v400
        %v482 = vadd.f32 %v289, %v403
        %v483 = vadd.f32 %v290, %v406
        %v484 = vadd.f32 %v291, %v409
        %v485 = vadd.f32 %v292, %v412
        %v486 = vadd.f32 %v293, %v415
        %v487 = vadd.f32 %v294, %v418
        %v488 = vadd.f32 %v295, %v421
        %v489 = vadd.f32 %v296, %v424
        %v490 = vadd.f32 %v297, %v427
        %v491 = vadd.f32 %v298, %v430
        %v492 = vadd.f32 %v299, %v433
        %v493 = vadd.f32 %v300, %v436
        %v494 = vadd.f32 %v301, %v439
        %v495 = vadd.f32 %v302, %v442
        %v496 = vadd.f32 %v303, %v445
        %v497 = vadd.f32 %v304, %v448
        %v498 = vadd.f32 %v305, %v451
        %v499 = vadd.f32 %v306, %v454
        %v500 = vadd.f32 %v307, %v457
        %v501 = vadd.f32 %v308, %v460
        %v502 = vadd.f32 %v309, %v463
        %v503 = vadd.f32 %v310, %v466
        %v504 = vadd.f32 %v311, %v469
        %v505 = vadd.f32 %v312, %v472
        %506 = vst [vmem:[#allocation2] sm:$0xff] %v474
        %507 = vst [vmem:[#allocation2 + $0x8] sm:$0xff] %v475
        %508 = vst [vmem:[#allocation2 + $0x10] sm:$0xff] %v476
        %509 = vst [vmem:[#allocation2 + $0x18] sm:$0xff] %v477
        %510 = vst [vmem:[#allocation2 + $0x20] sm:$0xff] %v478
        %511 = vst [vmem:[#allocation2 + $0x28] sm:$0xff] %v479
        %512 = vst [vmem:[#allocation2 + $0x30] sm:$0xff] %v480
        %513 = vst [vmem:[#allocation2 + $0x38] sm:$0xff] %v481
        %514 = vst [vmem:[#allocation2 + $0x40] sm:$0xff] %v482
        %515 = vst [vmem:[#allocation2 + $0x48] sm:$0xff] %v483
        %516 = vst [vmem:[#allocation2 + $0x50] sm:$0xff] %v484
        %517 = vst [vmem:[#allocation2 + $0x58] sm:$0xff] %v485
        %518 = vst [vmem:[#allocation2 + $0x60] sm:$0xff] %v486
        %519 = vst [vmem:[#allocation2 + $0x68] sm:$0xff] %v487
        %520 = vst [vmem:[#allocation2 + $0x70] sm:$0xff] %v488
        %521 = vst [vmem:[#allocation2 + $0x78] sm:$0xff] %v489
        %522 = vst [vmem:[#allocation2 + $0x80] sm:$0xff] %v490
        %523 = vst [vmem:[#allocation2 + $0x88] sm:$0xff] %v491
        %524 = vst [vmem:[#allocation2 + $0x90] sm:$0xff] %v492
        %525 = vst [vmem:[#allocation2 + $0x98] sm:$0xff] %v493
        %526 = vst [vmem:[#allocation2 + $0xa0] sm:$0xff] %v494
        %527 = vst [vmem:[#allocation2 + $0xa8] sm:$0xff] %v495
        %528 = vst [vmem:[#allocation2 + $0xb0] sm:$0xff] %v496
        %529 = vst [vmem:[#allocation2 + $0xb8] sm:$0xff] %v497
        %530 = vst [vmem:[#allocation2 + $0xc0] sm:$0xff] %v498
        %531 = vst [vmem:[#allocation2 + $0xc8] sm:$0xff] %v499
        %532 = vst [vmem:[#allocation2 + $0xd0] sm:$0xff] %v500
        %533 = vst [vmem:[#allocation2 + $0xd8] sm:$0xff] %v501
        %534 = vst [vmem:[#allocation2 + $0xe0] sm:$0xff] %v502
        %535 = vst [vmem:[#allocation2 + $0xe8] sm:$0xff] %v503
        %536 = vst [vmem:[#allocation2 + $0xf0] sm:$0xff] %v504
        %537 = vst [vmem:[#allocation2 + $0xf8] sm:$0xff] %v505
        // Predicated region
        $region41: #{tpu_custom_call.1} parent=27 // pred_check
          %p538 = pneg %p245
        $region42: #{tpu_custom_call.1} parent=27 // pred_check_branch
          %540 = sbr.rel (%p538) target = $region44
        $region43: #{tpu_custom_call.1} parent=27 // pred_region
          %v541 = vld [vmem:[#allocation2] sm:$0xff]
          %v542 = vld [vmem:[#allocation2 + $0x8] sm:$0xff]
          %v543 = vld [vmem:[#allocation2 + $0x10] sm:$0xff]
          %v544 = vld [vmem:[#allocation2 + $0x18] sm:$0xff]
          %v545 = vld [vmem:[#allocation2 + $0x20] sm:$0xff]
          %v546 = vld [vmem:[#allocation2 + $0x28] sm:$0xff]
          %v547 = vld [vmem:[#allocation2 + $0x30] sm:$0xff]
          %v548 = vld [vmem:[#allocation2 + $0x38] sm:$0xff]
          %v549 = vld [vmem:[#allocation2 + $0x40] sm:$0xff]
          %v550 = vld [vmem:[#allocation2 + $0x48] sm:$0xff]
          %v551 = vld [vmem:[#allocation2 + $0x50] sm:$0xff]
          %v552 = vld [vmem:[#allocation2 + $0x58] sm:$0xff]
          %v553 = vld [vmem:[#allocation2 + $0x60] sm:$0xff]
          %v554 = vld [vmem:[#allocation2 + $0x68] sm:$0xff]
          %v555 = vld [vmem:[#allocation2 + $0x70] sm:$0xff]
          %v556 = vld [vmem:[#allocation2 + $0x78] sm:$0xff]
          %v557 = vld [vmem:[#allocation2 + $0x80] sm:$0xff]
          %v558 = vld [vmem:[#allocation2 + $0x88] sm:$0xff]
          %v559 = vld [vmem:[#allocation2 + $0x90] sm:$0xff]
          %v560 = vld [vmem:[#allocation2 + $0x98] sm:$0xff]
          %v561 = vld [vmem:[#allocation2 + $0xa0] sm:$0xff]
          %v562 = vld [vmem:[#allocation2 + $0xa8] sm:$0xff]
          %v563 = vld [vmem:[#allocation2 + $0xb0] sm:$0xff]
          %v564 = vld [vmem:[#allocation2 + $0xb8] sm:$0xff]
          %v565 = vld [vmem:[#allocation2 + $0xc0] sm:$0xff]
          %v566 = vld [vmem:[#allocation2 + $0xc8] sm:$0xff]
          %v567 = vld [vmem:[#allocation2 + $0xd0] sm:$0xff]
          %v568 = vld [vmem:[#allocation2 + $0xd8] sm:$0xff]
          %v569 = vld [vmem:[#allocation2 + $0xe0] sm:$0xff]
          %v570 = vld [vmem:[#allocation2 + $0xe8] sm:$0xff]
          %v571 = vld [vmem:[#allocation2 + $0xf0] sm:$0xff]
          %v572 = vld [vmem:[#allocation2 + $0xf8] sm:$0xff]
          %v573 = vadd.f32 %v541, %v542
          %v574 = vadd.f32 %v573, %v543
          %v575 = vadd.f32 %v574, %v544
          %v576 = vadd.f32 %v575, %v545
          %v577 = vadd.f32 %v576, %v546
          %v578 = vadd.f32 %v577, %v547
          %v579 = vadd.f32 %v578, %v548
          %v580 = vadd.f32 %v579, %v549
          %v581 = vadd.f32 %v580, %v550
          %v582 = vadd.f32 %v581, %v551
          %v583 = vadd.f32 %v582, %v552
          %v584 = vadd.f32 %v583, %v553
          %v585 = vadd.f32 %v584, %v554
          %v586 = vadd.f32 %v585, %v555
          %v587 = vadd.f32 %v586, %v556
          %v588 = vadd.f32 %v587, %v557
          %v589 = vadd.f32 %v588, %v558
          %v590 = vadd.f32 %v589, %v559
          %v591 = vadd.f32 %v590, %v560
          %v592 = vadd.f32 %v591, %v561
          %v593 = vadd.f32 %v592, %v562
          %v594 = vadd.f32 %v593, %v563
          %v595 = vadd.f32 %v594, %v564
          %v596 = vadd.f32 %v595, %v565
          %v597 = vadd.f32 %v596, %v566
          %v598 = vadd.f32 %v597, %v567
          %v599 = vadd.f32 %v598, %v568
          %v600 = vadd.f32 %v599, %v569
          %v601 = vadd.f32 %v600, %v570
          %v602 = vadd.f32 %v601, %v571
          %v603 = vadd.f32 %v602, %v572
          %v604 = vrot.slane %v603, 4
          %v605 = vadd.f32 %v603, %v604
          %v606 = vrot.slane %v605, 2
          %v607 = vadd.f32 %v605, %v606
          %v608 = vrot.slane %v607, 1
          %v609 = vadd.f32 %v607, %v608
          %v610 = vmul.f32 %v541, %v541
          %v611 = vmul.f32 %v542, %v542
          %v612 = vmul.f32 %v543, %v543
          %v613 = vmul.f32 %v544, %v544
          %v614 = vmul.f32 %v545, %v545
          %v615 = vmul.f32 %v546, %v546
          %v616 = vmul.f32 %v547, %v547
          %v617 = vmul.f32 %v548, %v548
          %v618 = vmul.f32 %v549, %v549
          %v619 = vmul.f32 %v550, %v550
          %v620 = vmul.f32 %v551, %v551
          %v621 = vmul.f32 %v552, %v552
          %v622 = vmul.f32 %v553, %v553
          %v623 = vmul.f32 %v554, %v554
          %v624 = vmul.f32 %v555, %v555
          %v625 = vmul.f32 %v556, %v556
          %v626 = vmul.f32 %v557, %v557
          %v627 = vmul.f32 %v558, %v558
          %v628 = vmul.f32 %v559, %v559
          %v629 = vmul.f32 %v560, %v560
          %v630 = vmul.f32 %v561, %v561
          %v631 = vmul.f32 %v562, %v562
          %v632 = vmul.f32 %v563, %v563
          %v633 = vmul.f32 %v564, %v564
          %v634 = vmul.f32 %v565, %v565
          %v635 = vmul.f32 %v566, %v566
          %v636 = vmul.f32 %v567, %v567
          %v637 = vmul.f32 %v568, %v568
          %v638 = vmul.f32 %v569, %v569
          %v639 = vmul.f32 %v570, %v570
          %v640 = vmul.f32 %v571, %v571
          %v641 = vmul.f32 %v572, %v572
          %v642 = vadd.f32 %v610, %v611
          %v643 = vadd.f32 %v642, %v612
          %v644 = vadd.f32 %v643, %v613
          %v645 = vadd.f32 %v644, %v614
          %v646 = vadd.f32 %v645, %v615
          %v647 = vadd.f32 %v646, %v616
          %v648 = vadd.f32 %v647, %v617
          %v649 = vadd.f32 %v648, %v618
          %v650 = vadd.f32 %v649, %v619
          %v651 = vadd.f32 %v650, %v620
          %v652 = vadd.f32 %v651, %v621
          %v653 = vadd.f32 %v652, %v622
          %v654 = vadd.f32 %v653, %v623
          %v655 = vadd.f32 %v654, %v624
          %v656 = vadd.f32 %v655, %v625
          %v657 = vadd.f32 %v656, %v626
          %v658 = vadd.f32 %v657, %v627
          %v659 = vadd.f32 %v658, %v628
          %v660 = vadd.f32 %v659, %v629
          %v661 = vadd.f32 %v660, %v630
          %v662 = vadd.f32 %v661, %v631
          %v663 = vadd.f32 %v662, %v632
          %v664 = vadd.f32 %v663, %v633
          %v665 = vadd.f32 %v664, %v634
          %v666 = vadd.f32 %v665, %v635
          %v667 = vadd.f32 %v666, %v636
          %v668 = vadd.f32 %v667, %v637
          %v669 = vadd.f32 %v668, %v638
          %v670 = vadd.f32 %v669, %v639
          %v671 = vadd.f32 %v670, %v640
          %v672 = vadd.f32 %v671, %v641
          %v673 = vrot.slane %v672, 4
          %v674 = vadd.f32 %v672, %v673
          %v675 = vrot.slane %v674, 2
          %v676 = vadd.f32 %v674, %v675
          %v677 = vrot.slane %v676, 1
          %v678 = vadd.f32 %v676, %v677
          %vm679 = vcmask 1040384
          %v680 = vsel %vm679, %v609, %v678
          %681 = vst [vmem:[%s241] sm:$0x3] %v680
          %682 = vst [vmem:[%s234] sm:$0xff] %v541
          %683 = vst [vmem:[%s234 + $0x8] sm:$0xff] %v542
          %684 = vst [vmem:[%s234 + $0x10] sm:$0xff] %v543
          %685 = vst [vmem:[%s234 + $0x18] sm:$0xff] %v544
          %686 = vst [vmem:[%s234 + $0x20] sm:$0xff] %v545
          %687 = vst [vmem:[%s234 + $0x28] sm:$0xff] %v546
          %688 = vst [vmem:[%s234 + $0x30] sm:$0xff] %v547
          %689 = vst [vmem:[%s234 + $0x38] sm:$0xff] %v548
          %690 = vst [vmem:[%s234 + $0x40] sm:$0xff] %v549
          %691 = vst [vmem:[%s234 + $0x48] sm:$0xff] %v550
          %692 = vst [vmem:[%s234 + $0x50] sm:$0xff] %v551
          %693 = vst [vmem:[%s234 + $0x58] sm:$0xff] %v552
          %694 = vst [vmem:[%s234 + $0x60] sm:$0xff] %v553
          %695 = vst [vmem:[%s234 + $0x68] sm:$0xff] %v554
          %696 = vst [vmem:[%s234 + $0x70] sm:$0xff] %v555
          %697 = vst [vmem:[%s234 + $0x78] sm:$0xff] %v556
          %698 = vst [vmem:[%s234 + $0x80] sm:$0xff] %v557
          %699 = vst [vmem:[%s234 + $0x88] sm:$0xff] %v558
          %700 = vst [vmem:[%s234 + $0x90] sm:$0xff] %v559
          %701 = vst [vmem:[%s234 + $0x98] sm:$0xff] %v560
          %702 = vst [vmem:[%s234 + $0xa0] sm:$0xff] %v561
          %703 = vst [vmem:[%s234 + $0xa8] sm:$0xff] %v562
          %704 = vst [vmem:[%s234 + $0xb0] sm:$0xff] %v563
          %705 = vst [vmem:[%s234 + $0xb8] sm:$0xff] %v564
          %706 = vst [vmem:[%s234 + $0xc0] sm:$0xff] %v565
          %707 = vst [vmem:[%s234 + $0xc8] sm:$0xff] %v566
          %708 = vst [vmem:[%s234 + $0xd0] sm:$0xff] %v567
          %709 = vst [vmem:[%s234 + $0xd8] sm:$0xff] %v568
          %710 = vst [vmem:[%s234 + $0xe0] sm:$0xff] %v569
          %711 = vst [vmem:[%s234 + $0xe8] sm:$0xff] %v570
          %712 = vst [vmem:[%s234 + $0xf0] sm:$0xff] %v571
          %713 = vst [vmem:[%s234 + $0xf8] sm:$0xff] %v572
        $region44: #{tpu_custom_call.1} parent=27 // pred_fallthru
          _
        %s714 = sand.u32 %s99, 1
        %s715 = scalar_lea.sflag [#allocation5], %s714
        %s716 = sand.u32 %s99, 1
        %s717 = smul.addr %s716, 256
        %s718 = scalar_lea.vmem [#allocation8], %s717
        %s719 = sand.u32 %s125, 1
        %s720 = scalar_lea.sflag [#allocation10], %s719
        %s721 = sand.u32 %s125, 1
        %s722 = smul.addr %s721, 2
        %s723 = scalar_lea.vmem [#allocation9], %s722
        // Predicated region
        $region45: #{tpu_custom_call.1} parent=27 // pred_check
          %p724 = pneg %p109
        $region46: #{tpu_custom_call.1} parent=27 // pred_check_branch
          %726 = sbr.rel (%p724) target = $region48
        $region47: #{tpu_custom_call.1} parent=27 // pred_region
          %s727 = smul.u32 32, %s29
          %729 = vsyncadd %s715, 0
          %s730 = smul.addr %s727, 8
          %s731 = scalar_lea.hbm %s2, %s730
          %s732 = sshll.u32 %s718, 4
          %s733 = int_to_ptr.vmem [resolvable:$true] %s732
          %s734 = sshll.u32 %s731, 4
          %s735 = int_to_ptr.hbm [resolvable:$true] %s734
          %740 = dma.vmem_to_hbm [thread:$0]  %s733, 4096, %s735, %s715, 128, 128, 8
        $region48: #{tpu_custom_call.1} parent=27 // pred_fallthru
          _
        // Predicated region
        $region49: #{tpu_custom_call.1} parent=27 // pred_check
          %p741 = pneg %p135
        $region50: #{tpu_custom_call.1} parent=27 // pred_check_branch
          %743 = sbr.rel (%p741) target = $region52
        $region51: #{tpu_custom_call.1} parent=27 // pred_region
          %745 = vsyncadd %s720, 0
          %s746 = smul.addr %s29, 2
          %s747 = scalar_lea.hbm %s3, %s746
          %s749 = sshll.u32 %s723, 4
          %s750 = int_to_ptr.vmem [resolvable:$true] %s749
          %s751 = sshll.u32 %s747, 4
          %s752 = int_to_ptr.hbm [resolvable:$true] %s751
          %754 = dma.vmem_to_hbm [thread:$0]  %s750, 32, %s752, %s720
        $region52: #{tpu_custom_call.1} parent=27 // pred_fallthru
          _
      $region28: #{tpu_custom_call.1} parent=5 // pred_fallthru
        _
      %p755 = scmp.le.s32.totalorder 2, %s20
      // Predicated region
      $region53: #{tpu_custom_call.1} parent=5 // pred_check
        %p756 = pneg %p755
      $region54: #{tpu_custom_call.1} parent=5 // pred_check_branch
        %758 = sbr.rel (%p756) target = $region56
      $region55: #{tpu_custom_call.1} parent=5 // pred_region
        %s759 = ssub.s32 %s20, 2
        // Predicated region
        $region57: #{tpu_custom_call.1} parent=55 // pred_check
          %p760 = pneg %p115
        $region58: #{tpu_custom_call.1} parent=55 // pred_check_branch
          %762 = sbr.rel (%p760) target = $region60
        $region59: #{tpu_custom_call.1} parent=55 // pred_region
          %s763 = sand.u32 %s100, 1
          %s764 = scalar_lea.sflag [#allocation5], %s763
          %s765 = sand.u32 %s100, 1
          %s766 = smul.addr %s765, 256
          %s767 = scalar_lea.vmem [#allocation8], %s766
          %769 = dma.done %s764, 4096
        $region60: #{tpu_custom_call.1} parent=55 // pred_fallthru
          _
        // Predicated region
        $region61: #{tpu_custom_call.1} parent=55 // pred_check
          %p770 = pneg %p141
        $region62: #{tpu_custom_call.1} parent=55 // pred_check_branch
          %772 = sbr.rel (%p770) target = $region64
        $region63: #{tpu_custom_call.1} parent=55 // pred_region
          %s773 = sand.u32 %s126, 1
          %s774 = scalar_lea.sflag [#allocation10], %s773
          %s775 = sand.u32 %s126, 1
          %s776 = smul.addr %s775, 2
          %s777 = scalar_lea.vmem [#allocation9], %s776
          %779 = dma.done %s774, 32
        $region64: #{tpu_custom_call.1} parent=55 // pred_fallthru
          _
      $region56: #{tpu_custom_call.1} parent=5 // pred_fallthru
        _
    $region6: #{tpu_custom_call.1} parent=1 // loop_footer
      %s24 = sadd.s32 1, %s20
    $region7: #{tpu_custom_call.1} parent=1 // loop_footer_branch
      %19 = sbr.rel target = $region3
    $region8: #{tpu_custom_call.1} parent=1 // loop_exit
      _
    %780 = vsyncpa [#allocation4], 1
    %s781 = scalar_lea.sflag [#allocation4], 1
    %782 = vsyncpa %s781, 1
    %783 = vsyncpa [#allocation7], 1
    %784 = vsyncpa [#allocation5], 1
    %s785 = scalar_lea.sflag [#allocation5], 1
    %786 = vsyncpa %s785, 1
    %787 = vsyncpa [#allocation10], 1
    %s788 = scalar_lea.sflag [#allocation10], 1
    %789 = vsyncpa %s788, 1

</llo_original>
